<compile_context>
chip_gen: v5e
topology: v5e:2x2
jax: 0.10.0
libtpu: 0.0.40
codegen_flags: <defaults>
</compile_context>

<pallas_src>
import functools

import jax
import jax.numpy as jnp
from jax import lax
from jax.experimental import pallas as pl
from jax.experimental.pallas import tpu as pltpu


def _round_up(x: int, m: int) -> int:
    return ((x + m - 1) // m) * m


def _cdiv(a: int, b: int) -> int:
    return (a + b - 1) // b


def _sigmoid(z):
    # tanh formulation: single EUP op, keeps the divide off the VALU slot.
    return 0.5 * (jnp.tanh(0.5 * z) + 1.0)


def mlp_kernel(x_ref, w1_ref, b1_ref, w2_ref, b2_ref, w3_ref, b3_ref, o_ref):
    x = x_ref[...]                                               # [TB, 16]
    # Layer 1: contract the 16-wide feature axes of W1 [30,16] and x [TB,16]
    # -> [30, TB]; this puts batch on the lane axis for the rest of the net.
    h1 = lax.dot_general(w1_ref[...], x,
                         dimension_numbers=(((1,), (1,)), ((), ())),
                         preferred_element_type=jnp.float32)
    h1 = _sigmoid(h1 + b1_ref[...])                              # [30, TB]
    # Layer 2: [30,30] @ [30,TB] + [30,1]
    h2 = jnp.dot(w2_ref[...], h1, preferred_element_type=jnp.float32)
    h2 = _sigmoid(h2 + b2_ref[...])                              # [30, TB]
    # Layer 3: [1,30] @ [30,TB] + [1,1]
    h3 = jnp.dot(w3_ref[...], h2, preferred_element_type=jnp.float32)
    o_ref[...] = _sigmoid(h3 + b3_ref[...]).astype(o_ref.dtype)  # [1, TB]


@functools.partial(jax.jit, static_argnames=("block_batch",))
def neural_network_forward(x, params, *, block_batch: int = 16384):
    """x: [B, 16] float32.  params: weights [out,in], biases [out,1]."""
    w1, b1 = params["w1"], params["b1"]   # [30,16], [30,1]
    w2, b2 = params["w2"], params["b2"]   # [30,30], [30,1]
    w3, b3 = params["w3"], params["b3"]   # [1,30],  [1,1]

    B, D_in = x.shape

    # Pad the batch only to a multiple of 128 (lane width), and only if needed.
    b_pad = _round_up(B, 128)
    if b_pad != B:
        x = jnp.pad(x, ((0, b_pad - B), (0, 0)))

    # Batch tile: multiple of 128, capped by block_batch and by b_pad, and
    # split into >=2 tiles when possible so v7x's two TCs both get work.
    tb = min(_round_up(block_batch, 128), b_pad)
    if b_pad >= 256:
        tb = min(tb, _round_up(_cdiv(b_pad, 2), 128))
    n_tiles = _cdiv(b_pad, tb)   # last tile may overhang; stores are masked.

    # Tiny weights/biases: one full block, same block every grid step.
    def full(a):
        return pl.BlockSpec(a.shape, lambda i: (0,) * a.ndim)

    out_t = pl.pallas_call(
        mlp_kernel,
        out_shape=jax.ShapeDtypeStruct((1, b_pad), jnp.float32),
        grid=(n_tiles,),
        in_specs=[
            pl.BlockSpec((tb, D_in), lambda i: (i, 0)),   # x tile, pipelined
            full(w1), full(b1), full(w2), full(b2), full(w3), full(b3),
        ],
        out_specs=pl.BlockSpec((1, tb), lambda i: (0, i)),
        compiler_params=pltpu.CompilerParams(
            dimension_semantics=("parallel",),            # megacore on v7x
        ),
    )(x, w1, b1, w2, b2, w3, b3)

    # Back to the PyTorch [B, 1] layout, dropping padded columns.
    return out_t[:, :B].T


def init_params(key):
    """Deterministic init mirroring nn.Linear ([out,in] weights, [out,1] bias)."""
    ks = jax.random.split(key, 6)

    def linear(kw, kb, fan_in, fan_out):
        bound = 1.0 / jnp.sqrt(fan_in)
        w = jax.random.uniform(kw, (fan_out, fan_in), jnp.float32, -bound, bound)
        b = jax.random.uniform(kb, (fan_out, 1), jnp.float32, -bound, bound)
        return w, b

    w1, b1 = linear(ks[0], ks[1], 16, 30)
    w2, b2 = linear(ks[2], ks[3], 30, 30)
    w3, b3 = linear(ks[4], ks[5], 30, 1)
    return {"w1": w1, "b1": b1, "w2": w2, "b2": b2, "w3": w3, "b3": b3}


if __name__ == "__main__":
    key = jax.random.PRNGKey(0)
    k_params, k_x = jax.random.split(key)

    params = init_params(k_params)
    x = jax.random.normal(k_x, (8, 16), dtype=jnp.float32)  # small example batch

    out = neural_network_forward(x, params)
    out = jax.block_until_ready(out)

    # Pure-JAX reference (PyTorch nn.Linear semantics: x @ W.T + b).
    def ref(x, p):
        h = jax.nn.sigmoid(x @ p["w1"].T + p["b1"].T)
        h = jax.nn.sigmoid(h @ p["w2"].T + p["b2"].T)
        return jax.nn.sigmoid(h @ p["w3"].T + p["b3"].T)

    expected = ref(x, params)
    assert out.shape == (8, 1), f"bad shape {out.shape}"
    assert jnp.allclose(out, expected, atol=1e-5), "mismatch vs reference"

    print("KERNEL_OK")
</pallas_src>

<mosaic_0001>
module attributes {stable_mosaic.version = 11 : i64} {
  func.func @mlp_kernel(%arg0: i32, %arg1: memref<128x16xf32, #tpu.memory_space<vmem>>, %arg2: memref<30x16xf32, #tpu.memory_space<vmem>>, %arg3: memref<30x1xf32, #tpu.memory_space<vmem>>, %arg4: memref<30x30xf32, #tpu.memory_space<vmem>>, %arg5: memref<30x1xf32, #tpu.memory_space<vmem>>, %arg6: memref<1x30xf32, #tpu.memory_space<vmem>>, %arg7: memref<1x1xf32, #tpu.memory_space<vmem>>, %arg8: memref<1x128xf32, #tpu.memory_space<vmem>>) attributes {dimension_semantics = [#tpu.dimension_semantics<parallel>], iteration_bounds = array<i64: 1>, scalar_prefetch = 0 : i64, scratch_operands = 0 : i64, tpu.core_type = #tpu.core_type<tc>, window_params = [{transform_indices = @transform_0, window_bounds = array<i64: 128, 16>}, {pipeline_mode = #tpu.pipeline_mode<synchronous>, transform_indices = @transform_1, window_bounds = array<i64: 30, 16>}, {pipeline_mode = #tpu.pipeline_mode<synchronous>, transform_indices = @transform_2, window_bounds = array<i64: 30, 1>}, {pipeline_mode = #tpu.pipeline_mode<synchronous>, transform_indices = @transform_3, window_bounds = array<i64: 30, 30>}, {pipeline_mode = #tpu.pipeline_mode<synchronous>, transform_indices = @transform_4, window_bounds = array<i64: 30, 1>}, {pipeline_mode = #tpu.pipeline_mode<synchronous>, transform_indices = @transform_5, window_bounds = array<i64: 1, 30>}, {pipeline_mode = #tpu.pipeline_mode<synchronous>, transform_indices = @transform_6, window_bounds = array<i64: 1, 1>}, {transform_indices = @transform_7, window_bounds = array<i64: 1, 128>}]} {
    %c0 = arith.constant 0 : index
    %c0_0 = arith.constant 0 : index
    %0 = vector.load %arg1[%c0, %c0_0] : memref<128x16xf32, #tpu.memory_space<vmem>>, vector<128x16xf32>
    %c0_1 = arith.constant 0 : index
    %c0_2 = arith.constant 0 : index
    %1 = vector.load %arg2[%c0_1, %c0_2] : memref<30x16xf32, #tpu.memory_space<vmem>>, vector<30x16xf32>
    %cst = arith.constant dense<0.000000e+00> : vector<30x128xf32>
    %2 = tpu.matmul %1, %0, %cst {dimension_numbers = #tpu.dot_dimension_numbers<[1], [1], [0], [0], [0, 0, 1, 0], [], []>} : vector<30x16xf32>, vector<128x16xf32>, vector<30x128xf32> -> vector<30x128xf32>
    %c0_3 = arith.constant 0 : index
    %c0_4 = arith.constant 0 : index
    %3 = vector.load %arg3[%c0_3, %c0_4] : memref<30x1xf32, #tpu.memory_space<vmem>>, vector<30x1xf32>
    %4 = vector.broadcast %3 : vector<30x1xf32> to vector<30x128xf32>
    %5 = arith.addf %2, %4 : vector<30x128xf32>
    %cst_5 = arith.constant 5.000000e-01 : f32
    %6 = vector.broadcast %cst_5 : f32 to vector<30x128xf32>
    %7 = arith.mulf %6, %5 : vector<30x128xf32>
    %8 = math.tanh %7 : vector<30x128xf32>
    %cst_6 = arith.constant 1.000000e+00 : f32
    %9 = vector.broadcast %cst_6 : f32 to vector<30x128xf32>
    %10 = arith.addf %8, %9 : vector<30x128xf32>
    %cst_7 = arith.constant 5.000000e-01 : f32
    %11 = vector.broadcast %cst_7 : f32 to vector<30x128xf32>
    %12 = arith.mulf %11, %10 : vector<30x128xf32>
    %c0_8 = arith.constant 0 : index
    %c0_9 = arith.constant 0 : index
    %13 = vector.load %arg4[%c0_8, %c0_9] : memref<30x30xf32, #tpu.memory_space<vmem>>, vector<30x30xf32>
    %cst_10 = arith.constant dense<0.000000e+00> : vector<30x128xf32>
    %14 = tpu.matmul %13, %12, %cst_10 {dimension_numbers = #tpu.dot_dimension_numbers<[1], [0], [0], [1], [0, 0, 1, 1], [], []>} : vector<30x30xf32>, vector<30x128xf32>, vector<30x128xf32> -> vector<30x128xf32>
    %c0_11 = arith.constant 0 : index
    %c0_12 = arith.constant 0 : index
    %15 = vector.load %arg5[%c0_11, %c0_12] : memref<30x1xf32, #tpu.memory_space<vmem>>, vector<30x1xf32>
    %16 = vector.broadcast %15 : vector<30x1xf32> to vector<30x128xf32>
    %17 = arith.addf %14, %16 : vector<30x128xf32>
    %cst_13 = arith.constant 5.000000e-01 : f32
    %18 = vector.broadcast %cst_13 : f32 to vector<30x128xf32>
    %19 = arith.mulf %18, %17 : vector<30x128xf32>
    %20 = math.tanh %19 : vector<30x128xf32>
    %cst_14 = arith.constant 1.000000e+00 : f32
    %21 = vector.broadcast %cst_14 : f32 to vector<30x128xf32>
    %22 = arith.addf %20, %21 : vector<30x128xf32>
    %cst_15 = arith.constant 5.000000e-01 : f32
    %23 = vector.broadcast %cst_15 : f32 to vector<30x128xf32>
    %24 = arith.mulf %23, %22 : vector<30x128xf32>
    %c0_16 = arith.constant 0 : index
    %c0_17 = arith.constant 0 : index
    %25 = vector.load %arg6[%c0_16, %c0_17] : memref<1x30xf32, #tpu.memory_space<vmem>>, vector<1x30xf32>
    %cst_18 = arith.constant dense<0.000000e+00> : vector<1x128xf32>
    %26 = tpu.matmul %25, %24, %cst_18 {dimension_numbers = #tpu.dot_dimension_numbers<[1], [0], [0], [1], [0, 0, 1, 1], [], []>} : vector<1x30xf32>, vector<30x128xf32>, vector<1x128xf32> -> vector<1x128xf32>
    %c0_19 = arith.constant 0 : index
    %c0_20 = arith.constant 0 : index
    %27 = vector.load %arg7[%c0_19, %c0_20] : memref<1x1xf32, #tpu.memory_space<vmem>>, vector<1x1xf32>
    %28 = vector.broadcast %27 : vector<1x1xf32> to vector<1x128xf32>
    %29 = arith.addf %26, %28 : vector<1x128xf32>
    %cst_21 = arith.constant 5.000000e-01 : f32
    %30 = vector.broadcast %cst_21 : f32 to vector<1x128xf32>
    %31 = arith.mulf %30, %29 : vector<1x128xf32>
    %32 = math.tanh %31 : vector<1x128xf32>
    %cst_22 = arith.constant 1.000000e+00 : f32
    %33 = vector.broadcast %cst_22 : f32 to vector<1x128xf32>
    %34 = arith.addf %32, %33 : vector<1x128xf32>
    %cst_23 = arith.constant 5.000000e-01 : f32
    %35 = vector.broadcast %cst_23 : f32 to vector<1x128xf32>
    %36 = arith.mulf %35, %34 : vector<1x128xf32>
    %c0_24 = arith.constant 0 : index
    %c0_25 = arith.constant 0 : index
    %37 = vector.load %arg8[%c0_24, %c0_25] : memref<1x128xf32, #tpu.memory_space<vmem>>, vector<1x128xf32>
    tpu.vector_store %arg8[%c0_24, %c0_25], %36 {strides = array<i32>} : memref<1x128xf32, #tpu.memory_space<vmem>>, vector<1x128xf32>,
    return
  }
  func.func @transform_0(%arg0: i32) -> (i32, i32) {
    %c0_i32 = arith.constant 0 : i32
    %c0_i32_0 = arith.constant 0 : i32
    return %arg0, %c0_i32 : i32, i32
  }
  func.func @transform_1(%arg0: i32) -> (i32, i32) {
    %c0_i32 = arith.constant 0 : i32
    %c0_i32_0 = arith.constant 0 : i32
    %c0_i32_1 = arith.constant 0 : i32
    return %c0_i32, %c0_i32_0 : i32, i32
  }
  func.func @transform_2(%arg0: i32) -> (i32, i32) {
    %c0_i32 = arith.constant 0 : i32
    %c0_i32_0 = arith.constant 0 : i32
    %c0_i32_1 = arith.constant 0 : i32
    return %c0_i32, %c0_i32_0 : i32, i32
  }
  func.func @transform_3(%arg0: i32) -> (i32, i32) {
    %c0_i32 = arith.constant 0 : i32
    %c0_i32_0 = arith.constant 0 : i32
    %c0_i32_1 = arith.constant 0 : i32
    return %c0_i32, %c0_i32_0 : i32, i32
  }
  func.func @transform_4(%arg0: i32) -> (i32, i32) {
    %c0_i32 = arith.constant 0 : i32
    %c0_i32_0 = arith.constant 0 : i32
    %c0_i32_1 = arith.constant 0 : i32
    return %c0_i32, %c0_i32_0 : i32, i32
  }
  func.func @transform_5(%arg0: i32) -> (i32, i32) {
    %c0_i32 = arith.constant 0 : i32
    %c0_i32_0 = arith.constant 0 : i32
    %c0_i32_1 = arith.constant 0 : i32
    return %c0_i32, %c0_i32_0 : i32, i32
  }
  func.func @transform_6(%arg0: i32) -> (i32, i32) {
    %c0_i32 = arith.constant 0 : i32
    %c0_i32_0 = arith.constant 0 : i32
    %c0_i32_1 = arith.constant 0 : i32
    return %c0_i32, %c0_i32_0 : i32, i32
  }
  func.func @transform_7(%arg0: i32) -> (i32, i32) {
    %c0_i32 = arith.constant 0 : i32
    %c0_i32_0 = arith.constant 0 : i32
    return %c0_i32, %arg0 : i32, i32
  }
}

</mosaic_0001>

<llo_original>
// kernel: neural_network_forward.1
$region0: #{neural_network_forward.1}
  #allocation0 [shape = 'u32[]', space=smem, size = 0x4, offset = 0x4, fixed_abs, tag = 'smem constant byte address 0x4 - core index']
  #allocation1 [shape = 'u32[72,128]{1,0:T(1,128)}', space=vmem, size = 0x9000, scoped, tag = 'internal scratch']
  #allocation2 [shape = 'f32[1,1]{1,0:T(1,128)S(1)}', space=vmem, size = 0x200, scoped, tag = 'scoped memory for neural_network_forward.1']
  %s0 = inlined_call_operand.vmem [shape: f32[128,16], index: 0, kind: input, shape index: {}]
  %s1 = inlined_call_operand.vmem [shape: f32[30,16], index: 1, kind: input, shape index: {}]
  %s2 = inlined_call_operand.vmem [shape: f32[30,1], index: 2, kind: input, shape index: {}]
  %s3 = inlined_call_operand.vmem [shape: f32[30,30], index: 3, kind: input, shape index: {}]
  %s4 = inlined_call_operand.vmem [shape: f32[30,1], index: 4, kind: input, shape index: {}]
  %s5 = inlined_call_operand.vmem [shape: f32[1,30], index: 5, kind: input, shape index: {}]
  %s6 = inlined_call_operand.<no memory space> [shape: f32[1,1], index: 6, kind: input, shape index: {}]
  %s7 = inlined_call_operand.vmem [shape: f32[1,128], index: 7, kind: output, shape index: {}]
  %s8 = sld [smem:[#allocation0]]
  $region38: #{neural_network_forward.1} parent=0
    _
  %s10 = ssub.s32 1, %s8
  %s11 = scalar_select 0, %s10, %s8
  %v12 = vstv %s6
  %13 = vst [vmem:[#allocation2] sm:$0x1] %v12
  // Predicated region
  $region2: #{neural_network_forward.1} parent=0 // pred_check
    _
  $region3: #{neural_network_forward.1} parent=0 // pred_check_branch
    %15 = sbr.rel (0) target = $region5
  $region4: #{neural_network_forward.1} parent=0 // pred_region
    _
  $region5: #{neural_network_forward.1} parent=0 // pred_fallthru
    _
  // Predicated region
  $region6: #{neural_network_forward.1} parent=0 // pred_check
    _
  $region7: #{neural_network_forward.1} parent=0 // pred_check_branch
    %17 = sbr.rel (0) target = $region9
  $region8: #{neural_network_forward.1} parent=0 // pred_region
    _
  $region9: #{neural_network_forward.1} parent=0 // pred_fallthru
    _
  // Predicated region
  $region10: #{neural_network_forward.1} parent=0 // pred_check
    _
  $region11: #{neural_network_forward.1} parent=0 // pred_check_branch
    %19 = sbr.rel (0) target = $region13
  $region12: #{neural_network_forward.1} parent=0 // pred_region
    _
  $region13: #{neural_network_forward.1} parent=0 // pred_fallthru
    _
  // Predicated region
  $region14: #{neural_network_forward.1} parent=0 // pred_check
    _
  $region15: #{neural_network_forward.1} parent=0 // pred_check_branch
    %21 = sbr.rel (0) target = $region17
  $region16: #{neural_network_forward.1} parent=0 // pred_region
    _
  $region17: #{neural_network_forward.1} parent=0 // pred_fallthru
    _
  // Predicated region
  $region18: #{neural_network_forward.1} parent=0 // pred_check
    _
  $region19: #{neural_network_forward.1} parent=0 // pred_check_branch
    %23 = sbr.rel (0) target = $region21
  $region20: #{neural_network_forward.1} parent=0 // pred_region
    _
  $region21: #{neural_network_forward.1} parent=0 // pred_fallthru
    _
  // Predicated region
  $region22: #{neural_network_forward.1} parent=0 // pred_check
    _
  $region23: #{neural_network_forward.1} parent=0 // pred_check_branch
    %25 = sbr.rel (0) target = $region25
  $region24: #{neural_network_forward.1} parent=0 // pred_region
    _
  $region25: #{neural_network_forward.1} parent=0 // pred_fallthru
    _
  // Predicated region
  $region26: #{neural_network_forward.1} parent=0 // pred_check
    _
  $region27: #{neural_network_forward.1} parent=0 // pred_check_branch
    %27 = sbr.rel (0) target = $region29
  $region28: #{neural_network_forward.1} parent=0 // pred_region
    _
  $region29: #{neural_network_forward.1} parent=0 // pred_fallthru
    _
  %v28 = vld [vmem:[%s0] sm:$0xff]
  %v29 = vld [vmem:[%s0 + $0x8] sm:$0xff]
  %v30 = vld [vmem:[%s0 + $0x10] sm:$0xff]
  %v31 = vld [vmem:[%s0 + $0x18] sm:$0xff]
  %v32 = vld [vmem:[%s0 + $0x20] sm:$0xff]
  %v33 = vld [vmem:[%s0 + $0x28] sm:$0xff]
  %v34 = vld [vmem:[%s0 + $0x30] sm:$0xff]
  %v35 = vld [vmem:[%s0 + $0x38] sm:$0xff]
  %v36 = vld [vmem:[%s0 + $0x40] sm:$0xff]
  %v37 = vld [vmem:[%s0 + $0x48] sm:$0xff]
  %v38 = vld [vmem:[%s0 + $0x50] sm:$0xff]
  %v39 = vld [vmem:[%s0 + $0x58] sm:$0xff]
  %v40 = vld [vmem:[%s0 + $0x60] sm:$0xff]
  %v41 = vld [vmem:[%s0 + $0x68] sm:$0xff]
  %v42 = vld [vmem:[%s0 + $0x70] sm:$0xff]
  %v43 = vld [vmem:[%s0 + $0x78] sm:$0xff]
  %v44 = vld [vmem:[%s1] sm:$0xff]
  %v45 = vld [vmem:[%s1 + $0x8] sm:$0xff]
  %v46 = vld [vmem:[%s1 + $0x10] sm:$0xff]
  %v47 = vld [vmem:[%s1 + $0x18] sm:$0x3f]
  %v48 = vld [vmem:[%s2] sm:$0xff]
  %v49 = vld [vmem:[%s2 + $0x8] sm:$0xff]
  %v50 = vld [vmem:[%s2 + $0x10] sm:$0xff]
  %v51 = vld [vmem:[%s2 + $0x18] sm:$0x3f]
  %53 = vset.pattern.permute.xlu0 0
  %54 = vperm.xlu0 %53, %v48
  %v55 = vpop.permute.xlu0 %54
  %58 = vset.pattern.permute.xlu0 0
  %59 = vperm.xlu0 %58, %v49
  %v60 = vpop.permute.xlu0 %59
  %63 = vset.pattern.permute.xlu0 0
  %64 = vperm.xlu0 %63, %v50
  %v65 = vpop.permute.xlu0 %64
  %68 = vset.pattern.permute.xlu0 0
  %69 = vperm.xlu0 %68, %v51
  %v70 = vpop.permute.xlu0 %69
  %vm72 = vcmask 130048
  %v74 = vsel %vm72, %v44, 0
  %v77 = vsel %vm72, %v45, 0
  %v80 = vsel %vm72, %v46, 0
  %v83 = vsel %vm72, %v47, 0
  %v86 = vsel %vm72, %v28, 0
  %v89 = vsel %vm72, %v29, 0
  %v92 = vsel %vm72, %v30, 0
  %v95 = vsel %vm72, %v31, 0
  %v98 = vsel %vm72, %v32, 0
  %v101 = vsel %vm72, %v33, 0
  %v104 = vsel %vm72, %v34, 0
  %v107 = vsel %vm72, %v35, 0
  %v110 = vsel %vm72, %v36, 0
  %v113 = vsel %vm72, %v37, 0
  %v116 = vsel %vm72, %v38, 0
  %v119 = vsel %vm72, %v39, 0
  %v122 = vsel %vm72, %v40, 0
  %v125 = vsel %vm72, %v41, 0
  %v128 = vsel %vm72, %v42, 0
  %v131 = vsel %vm72, %v43, 0
  %133 = vmatpush.xpose.msra.mxu0 %v131
  %134 = vmatpush.xpose.msra.mxu0 %v128
  %135 = vmatpush.xpose.msra.mxu0 %v125
  %136 = vmatpush.xpose.msra.mxu0 %v122
  %137 = vmatpush.xpose.msra.mxu0 %v119
  %138 = vmatpush.xpose.msra.mxu0 %v116
  %139 = vmatpush.xpose.msra.mxu0 %v113
  %140 = vmatpush.xpose.msra.mxu0 %v110
  %141 = vmatpush.xpose.msra.mxu0 %v107
  %142 = vmatpush.xpose.msra.mxu0 %v104
  %143 = vmatpush.xpose.msra.mxu0 %v101
  %144 = vmatpush.xpose.msra.mxu0 %v98
  %145 = vmatpush.xpose.msra.mxu0 %v95
  %146 = vmatpush.xpose.msra.mxu0 %v92
  %147 = vmatpush.xpose.msra.mxu0 %v89
  %148 = vmatpush.xpose.msra.mxu0 %v86
  %149 = vmatmul.f32.gmra.mxu0 %v74
  %v150 = vpop.f32.mrf.mxu0
  %v151 = vadd.f32 %v55, %v150
  %152 = vmatmul.f32.gmra.mxu0 %v77
  %v153 = vpop.f32.mrf.mxu0
  %v154 = vadd.f32 %v60, %v153
  %155 = vmatmul.f32.gmra.mxu0 %v80
  %v156 = vpop.f32.mrf.mxu0
  %v157 = vadd.f32 %v65, %v156
  %158 = vmatmul.f32.gmra.mxu0 %v83
  %v159 = vpop.f32.mrf.mxu0
  %v160 = vadd.f32 %v70, %v159
  %161 = vdwg.mxu0
  %v162 = vmul.f32 %v151, 0.5
  %v163 = vmul.f32 %v154, 0.5
  %v164 = vmul.f32 %v157, 0.5
  %v165 = vmul.f32 %v160, 0.5
  %v166 = vtanh.pop %v162
  %v167 = vtanh.pop %v163
  %v168 = vtanh.pop %v164
  %v169 = vtanh.pop %v165
  %v170 = vadd.f32 %v166, 1.0
  %v171 = vadd.f32 %v167, 1.0
  %v172 = vadd.f32 %v168, 1.0
  %v173 = vadd.f32 %v169, 1.0
  %v174 = vmul.f32 %v170, 0.5
  %v175 = vmul.f32 %v171, 0.5
  %v176 = vmul.f32 %v172, 0.5
  %v177 = vmul.f32 %v173, 0.5
  %v178 = vld [vmem:[%s3] sm:$0xff]
  %v179 = vld [vmem:[%s3 + $0x8] sm:$0xff]
  %v180 = vld [vmem:[%s3 + $0x10] sm:$0xff]
  %v181 = vld [vmem:[%s3 + $0x18] sm:$0x3f]
  %v182 = vld [vmem:[%s4] sm:$0xff]
  %v183 = vld [vmem:[%s4 + $0x8] sm:$0xff]
  %v184 = vld [vmem:[%s4 + $0x10] sm:$0xff]
  %v185 = vld [vmem:[%s4 + $0x18] sm:$0x3f]
  %187 = vset.pattern.permute.xlu0 0
  %188 = vperm.xlu0 %187, %v182
  %v189 = vpop.permute.xlu0 %188
  %192 = vset.pattern.permute.xlu0 0
  %193 = vperm.xlu0 %192, %v183
  %v194 = vpop.permute.xlu0 %193
  %197 = vset.pattern.permute.xlu0 0
  %198 = vperm.xlu0 %197, %v184
  %v199 = vpop.permute.xlu0 %198
  %202 = vset.pattern.permute.xlu0 0
  %203 = vperm.xlu0 %202, %v185
  %v204 = vpop.permute.xlu0 %203
  %vm206 = vcmask 244736
  %v208 = vsel %vm206, %v178, 0
  %v211 = vsel %vm206, %v179, 0
  %v214 = vsel %vm206, %v180, 0
  %v217 = vsel %vm206, %v181, 0
  %vm219 = vcmask 1045504
  %v221 = vsel %vm219, %v177, 0
  %223 = vmatpush.msra.mxu0 0.0
  %224 = vmatpush.msra.mxu0 0.0
  %225 = vmatpush.msra.mxu0 0.0
  %226 = vmatpush.msra.mxu0 0.0
  %227 = vmatpush.msra.mxu0 0.0
  %228 = vmatpush.msra.mxu0 0.0
  %229 = vmatpush.msra.mxu0 0.0
  %230 = vmatpush.msra.mxu0 0.0
  %231 = vmatpush.msra.mxu0 0.0
  %232 = vmatpush.msra.mxu0 0.0
  %233 = vmatpush.msra.mxu0 0.0
  %234 = vmatpush.msra.mxu0 0.0
  %235 = vmatpush.msra.mxu0 %v221
  %236 = vmatpush.msra.mxu0 %v176
  %237 = vmatpush.msra.mxu0 %v175
  %238 = vmatpush.msra.mxu0 %v174
  %239 = vmatmul.f32.gmra.mxu0 %v208
  %v240 = vpop.f32.mrf.mxu0
  %v241 = vadd.f32 %v189, %v240
  %242 = vmatmul.f32.gmra.mxu0 %v211
  %v243 = vpop.f32.mrf.mxu0
  %v244 = vadd.f32 %v194, %v243
  %245 = vmatmul.f32.gmra.mxu0 %v214
  %v246 = vpop.f32.mrf.mxu0
  %v247 = vadd.f32 %v199, %v246
  %248 = vmatmul.f32.gmra.mxu0 %v217
  %v249 = vpop.f32.mrf.mxu0
  %v250 = vadd.f32 %v204, %v249
  %251 = vdwg.mxu0
  %v252 = vmul.f32 %v241, 0.5
  %v253 = vmul.f32 %v244, 0.5
  %v254 = vmul.f32 %v247, 0.5
  %v255 = vmul.f32 %v250, 0.5
  %v256 = vtanh.pop %v252
  %v257 = vtanh.pop %v253
  %v258 = vtanh.pop %v254
  %v259 = vtanh.pop %v255
  %v260 = vadd.f32 %v256, 1.0
  %v261 = vadd.f32 %v257, 1.0
  %v262 = vadd.f32 %v258, 1.0
  %v263 = vadd.f32 %v259, 1.0
  %v264 = vmul.f32 %v260, 0.5
  %v265 = vmul.f32 %v261, 0.5
  %v266 = vmul.f32 %v262, 0.5
  %v267 = vmul.f32 %v263, 0.5
  %v268 = vld [vmem:[%s5] sm:$0x1]
  %v269 = vld [vmem:[#allocation2] sm:$0x1]
  %271 = vset.pattern.permute.xlu0 0
  %272 = vperm.xlu0 %271, %v269
  %v273 = vpop.permute.xlu0 %272
  %v275 = vperm.slane %v273, 0
  %v277 = vsel %vm206, %v268, 0
  %v280 = vsel %vm219, %v267, 0
  %282 = vmatpush.msra.mxu0 0.0
  %283 = vmatpush.msra.mxu0 0.0
  %284 = vmatpush.msra.mxu0 0.0
  %285 = vmatpush.msra.mxu0 0.0
  %286 = vmatpush.msra.mxu0 0.0
  %287 = vmatpush.msra.mxu0 0.0
  %288 = vmatpush.msra.mxu0 0.0
  %289 = vmatpush.msra.mxu0 0.0
  %290 = vmatpush.msra.mxu0 0.0
  %291 = vmatpush.msra.mxu0 0.0
  %292 = vmatpush.msra.mxu0 0.0
  %293 = vmatpush.msra.mxu0 0.0
  %294 = vmatpush.msra.mxu0 %v280
  %295 = vmatpush.msra.mxu0 %v266
  %296 = vmatpush.msra.mxu0 %v265
  %297 = vmatpush.msra.mxu0 %v264
  %298 = vmatmul.f32.gmra.mxu0 %v277
  %v299 = vpop.f32.mrf.mxu0
  %v300 = vadd.f32 %v275, %v299
  %301 = vdwg.mxu0
  %v302 = vmul.f32 %v300, 0.5
  %v303 = vtanh.pop %v302
  %v304 = vadd.f32 %v303, 1.0
  %v305 = vmul.f32 %v304, 0.5
  %306 = vst [vmem:[%s7] sm:$0x1] %v305
  // Predicated region
  $region30: #{neural_network_forward.1} parent=0 // pred_check
    _
  $region31: #{neural_network_forward.1} parent=0 // pred_check_branch
    %308 = sbr.rel (0) target = $region33
  $region32: #{neural_network_forward.1} parent=0 // pred_region
    _
  $region33: #{neural_network_forward.1} parent=0 // pred_fallthru
    _
  // Predicated region
  $region34: #{neural_network_forward.1} parent=0 // pred_check
    _
  $region35: #{neural_network_forward.1} parent=0 // pred_check_branch
    %310 = sbr.rel (0) target = $region37
  $region36: #{neural_network_forward.1} parent=0 // pred_region
    _
  $region37: #{neural_network_forward.1} parent=0 // pred_fallthru
    _

</llo_original>
